<compile_context>
chip_gen: v7x
topology: tpu7x:2x2x1
jax: 0.10.0
libtpu: 0.0.40
codegen_flags: <defaults>
</compile_context>

<pallas_src>
import functools

import jax
import jax.numpy as jnp
from jax import lax
from jax.experimental import pallas as pl
from jax.experimental.pallas import tpu as pltpu


def _round_up(v: int, m: int) -> int:
    return (v + m - 1) // m * m


def _cdiv(a: int, b: int) -> int:
    return (a + b - 1) // b


# ----------------------------- kernels ------------------------------------


def _sel_train_kernel(inv_temp_ref, logits_t_ref, uniform_t_ref, sel_ref,
                      *, d_valid, k_valid):
    """Gumbel-softmax selections in (D_pad, Kp) layout (softmax over axis 0 == D).

    Padded rows (>= d_valid) and padded columns (>= k_valid) are zeroed so the
    matmul RHS is exactly the transposed selection matrix, zero elsewhere.
    """
    lg = logits_t_ref[...]                                        # (Dp, Kp) f32
    u = uniform_t_ref[...]                                        # (Dp, Kp) f32
    dp, kp = lg.shape
    row = lax.broadcasted_iota(jnp.int32, (dp, kp), 0)
    col = lax.broadcasted_iota(jnp.int32, (dp, kp), 1)
    valid = (row < d_valid) & (col < k_valid)

    gumbel = -jnp.log(-jnp.log(u))                                # EUP (in-kernel)
    noisy = (lg + gumbel) * inv_temp_ref[0]
    noisy = jnp.where(valid, noisy, -1e30)                        # mask padding
    m = jnp.max(noisy, axis=0, keepdims=True)                     # (1, Kp)
    e = jnp.exp(noisy - m)
    s = jnp.sum(e, axis=0, keepdims=True)
    sel = e * pl.reciprocal(s, approx=True)
    sel_ref[...] = jnp.where(valid, sel, 0.0).astype(sel_ref.dtype)


def _sel_eval_kernel(logits_t_ref, sel_ref, *, d_valid, k_valid):
    """One-hot(argmax over D) selections in (D_pad, Kp) layout (first occurrence)."""
    lg = logits_t_ref[...]                                        # (Dp, Kp) f32
    dp, kp = lg.shape
    row = lax.broadcasted_iota(jnp.int32, (dp, kp), 0)
    col = lax.broadcasted_iota(jnp.int32, (dp, kp), 1)
    valid = (row < d_valid) & (col < k_valid)

    lgm = jnp.where(valid, lg, -1e30)
    mx = jnp.max(lgm, axis=0, keepdims=True)
    is_max = (lgm == mx) & valid
    idx = jnp.min(jnp.where(is_max, row, dp), axis=0, keepdims=True)   # (1, Kp)
    sel_ref[...] = ((row == idx) & (col < k_valid)).astype(sel_ref.dtype)


def _encode_matmul_kernel(x_ref, sel_ref, o_ref, *, d_valid, bk, mask_d):
    """encoded = x @ sel, tiled over (B tiles [parallel], D chunks [arbitrary]).

    Accumulates directly into the resident f32 output block (no scratch).
    """
    k = pl.program_id(1)

    @pl.when(k == 0)
    def _():
        o_ref[...] = jnp.zeros_like(o_ref)

    xt = x_ref[...]
    if mask_d:
        # Last D chunk overhangs the real D: zero garbage columns so a stray
        # NaN/Inf in the out-of-bounds region can never hit garbage*0 = NaN.
        cols = k * bk + lax.broadcasted_iota(jnp.int32, xt.shape, 1)
        xt = jnp.where(cols < d_valid, xt, 0.0)

    o_ref[...] += jnp.dot(
        xt.astype(jnp.bfloat16),               # bf16 MXU operand
        sel_ref[...],                          # already bf16
        preferred_element_type=jnp.float32,    # f32 accumulation
    )


# ----------------------------- wrappers ------------------------------------


def _tiling(B: int, D: int, K: int):
    Kp = _round_up(max(K, 128), 128)           # lane-dense selections / output
    bm = min(_round_up(B, 8), 512)
    # v7x has 2 TensorCores: keep >= 2 tiles on the "parallel" batch axis.
    if B >= 16 and _cdiv(B, bm) < 2:
        bm = _round_up(_cdiv(B, 2), 8)
    # Full-D block when it fits (no remainder handling), else 2048-wide chunks.
    bk = D if D <= 2048 else 2048
    D_pad = _cdiv(D, bk) * bk
    return bm, bk, Kp, D_pad


def _selections_train(logits, uniform, temp, Kp, D_pad):
    """(K, D) logits/uniform -> (D_pad, Kp) bf16 selection matrix (softmax, dim=1)."""
    K, D = logits.shape
    logits_t = jnp.zeros((D_pad, Kp), jnp.float32).at[:D, :K].set(logits.T)
    uniform_t = jnp.full((D_pad, Kp), 0.5, jnp.float32).at[:D, :K].set(uniform.T)
    inv_temp = (1.0 / jnp.asarray(temp, jnp.float32)).reshape(1)
    kern = functools.partial(_sel_train_kernel, d_valid=D, k_valid=K)
    return pl.pallas_call(
        kern,
        out_shape=jax.ShapeDtypeStruct((D_pad, Kp), jnp.bfloat16),
        in_specs=[
            pl.BlockSpec(memory_space=pltpu.SMEM),    # 1/temp scalar
            pl.BlockSpec(memory_space=pltpu.VMEM),    # logits.T (lane/row padded)
            pl.BlockSpec(memory_space=pltpu.VMEM),    # uniform.T (lane/row padded)
        ],
        out_specs=pl.BlockSpec(memory_space=pltpu.VMEM),
        compiler_params=pltpu.CompilerParams(vmem_limit_bytes=32 * 1024 * 1024),
    )(inv_temp, logits_t, uniform_t)


def _selections_eval(logits, Kp, D_pad):
    """(K, D) logits -> (D_pad, Kp) bf16 one-hot selection matrix (argmax, dim=1)."""
    K, D = logits.shape
    logits_t = jnp.zeros((D_pad, Kp), jnp.float32).at[:D, :K].set(logits.T)
    kern = functools.partial(_sel_eval_kernel, d_valid=D, k_valid=K)
    return pl.pallas_call(
        kern,
        out_shape=jax.ShapeDtypeStruct((D_pad, Kp), jnp.bfloat16),
        in_specs=[pl.BlockSpec(memory_space=pltpu.VMEM)],
        out_specs=pl.BlockSpec(memory_space=pltpu.VMEM),
        compiler_params=pltpu.CompilerParams(vmem_limit_bytes=32 * 1024 * 1024),
    )(logits_t)


def _encoded_matmul(x, sel, bm, bk):
    """out = x @ sel. x: (B, D) f32 (unpadded, streamed), sel: (D_pad, Kp) bf16."""
    B, D = x.shape
    D_pad, Kp = sel.shape
    grid = (_cdiv(B, bm), _cdiv(D, bk))       # (batch [parallel], D reduction [arbitrary])
    assert grid[1] * bk == D_pad
    mask_d = (D % bk) != 0

    kern = functools.partial(_encode_matmul_kernel, d_valid=D, bk=bk, mask_d=mask_d)
    return pl.pallas_call(
        kern,
        out_shape=jax.ShapeDtypeStruct((B, Kp), jnp.float32),
        grid_spec=pltpu.PrefetchScalarGridSpec(
            num_scalar_prefetch=0,
            grid=grid,
            in_specs=[
                pl.BlockSpec((bm, bk), lambda i, k: (i, k)),   # x tile (no HBM padding)
                pl.BlockSpec((bk, Kp), lambda i, k: (k, 0)),   # selections chunk
            ],
            out_specs=pl.BlockSpec((bm, Kp), lambda i, k: (i, 0)),
        ),
        compiler_params=pltpu.CompilerParams(
            dimension_semantics=("parallel", "arbitrary"),
            vmem_limit_bytes=32 * 1024 * 1024),
    )(x, sel)


def encoder_forward_train(x, logits, uniform, temp):
    """x: (B, D) f32, logits/uniform: (K, D) f32, temp: scalar -> (B, K) f32."""
    B, D = x.shape
    K, D2 = logits.shape
    assert D == D2
    bm, bk, Kp, D_pad = _tiling(B, D, K)
    sel = _selections_train(logits, uniform, temp, Kp, D_pad)
    out = _encoded_matmul(x, sel, bm, bk)
    return out[:, :K]


def encoder_forward_eval(x, logits):
    """x: (B, D) f32, logits: (K, D) f32 -> (B, K) f32."""
    B, D = x.shape
    K, D2 = logits.shape
    assert D == D2
    bm, bk, Kp, D_pad = _tiling(B, D, K)
    sel = _selections_eval(logits, Kp, D_pad)
    out = _encoded_matmul(x, sel, bm, bk)
    return out[:, :K]


# ------------------------- reference (plain JAX) ----------------------------


def _ref_train(x, logits, uniform, temp):
    gumbel = -jnp.log(-jnp.log(uniform))
    noisy = (logits + gumbel) / temp
    samples = jax.nn.softmax(noisy, axis=1)
    return x @ samples.T


def _ref_eval(x, logits):
    idx = jnp.argmax(logits, axis=1)
    sel = jax.nn.one_hot(idx, logits.shape[1], dtype=jnp.float32)
    return x @ sel.T


# ------------------------------- main ---------------------------------------


if __name__ == "__main__":
    B = 8            # batch
    D_IN = 128       # input_size
    K_OUT = 16       # output_size (latent / selected features)
    MAX_TEMP = 10.0  # module buffer `temp` initialized to max_temp

    key = jax.random.PRNGKey(0)
    k_x, k_logits, k_unif = jax.random.split(key, 3)

    x = jax.random.normal(k_x, (B, D_IN), dtype=jnp.float32)

    # Xavier normal init for logits (shape (output_size, input_size)).
    xavier_std = (2.0 / (D_IN + K_OUT)) ** 0.5
    logits = xavier_std * jax.random.normal(k_logits, (K_OUT, D_IN), dtype=jnp.float32)

    # torch.rand equivalent for the Gumbel sample (drawn host-side so the kernel
    # stays deterministic and testable against the reference).
    uniform = jax.random.uniform(
        k_unif, (K_OUT, D_IN), dtype=jnp.float32, minval=1e-7, maxval=1.0
    )

    # Training-mode forward (nn.Module default is training=True).
    enc_train = encoder_forward_train(x, logits, uniform, MAX_TEMP)
    jax.block_until_ready(enc_train)

    # Eval-mode forward (argmax / one-hot feature selection).
    enc_eval = encoder_forward_eval(x, logits)
    jax.block_until_ready(enc_eval)

    # Correctness checks (tolerance accounts for bf16 MXU operands + approx vrcp).
    ref_t = _ref_train(x, logits, uniform, MAX_TEMP)
    ref_e = _ref_eval(x, logits)
    assert enc_train.shape == (B, K_OUT) and enc_eval.shape == (B, K_OUT)
    assert jnp.allclose(enc_train, ref_t, atol=2e-2, rtol=2e-2)
    assert jnp.allclose(enc_eval, ref_e, atol=2e-2, rtol=2e-2)

    print("KERNEL_OK")
</pallas_src>

<mosaic_0001>
module attributes {stable_mosaic.version = 11 : i64} {
  func.func @_sel_train_kernel(%arg0: memref<1xf32, #tpu.memory_space<smem>>, %arg1: memref<128x128xf32, #tpu.memory_space<vmem>>, %arg2: memref<128x128xf32, #tpu.memory_space<vmem>>, %arg3: memref<128x128xbf16, #tpu.memory_space<vmem>>) attributes {dimension_semantics = [], scalar_prefetch = 0 : i64, scratch_operands = 0 : i64, tpu.core_type = #tpu.core_type<tc>} {
    %c0 = arith.constant 0 : index
    %c0_0 = arith.constant 0 : index
    %0 = vector.load %arg1[%c0, %c0_0] : memref<128x128xf32, #tpu.memory_space<vmem>>, vector<128x128xf32>
    %c0_1 = arith.constant 0 : index
    %c0_2 = arith.constant 0 : index
    %1 = vector.load %arg2[%c0_1, %c0_2] : memref<128x128xf32, #tpu.memory_space<vmem>>, vector<128x128xf32>
    %2 = tpu.iota {dimensions = array<i32: 0>} : vector<128x128xi32>
    %3 = tpu.iota {dimensions = array<i32: 1>} : vector<128x128xi32>
    %c128_i32 = arith.constant 128 : i32
    %4 = vector.broadcast %c128_i32 : i32 to vector<128x128xi32>
    %5 = arith.cmpi slt, %2, %4 : vector<128x128xi32>
    %c16_i32 = arith.constant 16 : i32
    %6 = vector.broadcast %c16_i32 : i32 to vector<128x128xi32>
    %7 = arith.cmpi slt, %3, %6 : vector<128x128xi32>
    %8 = arith.andi %5, %7 : vector<128x128xi1>
    %9 = math.log %1 : vector<128x128xf32>
    %cst = arith.constant 0.000000e+00 : f32
    %10 = vector.broadcast %cst : f32 to vector<128x128xf32>
    %11 = arith.subf %10, %9 : vector<128x128xf32>
    %12 = math.log %11 : vector<128x128xf32>
    %cst_3 = arith.constant 0.000000e+00 : f32
    %13 = vector.broadcast %cst_3 : f32 to vector<128x128xf32>
    %14 = arith.subf %13, %12 : vector<128x128xf32>
    %15 = arith.addf %0, %14 : vector<128x128xf32>
    %c0_4 = arith.constant 0 : index
    %16 = memref.load %arg0[%c0_4] : memref<1xf32, #tpu.memory_space<smem>>
    %17 = vector.broadcast %16 : f32 to vector<128x128xf32>
    %18 = arith.mulf %15, %17 : vector<128x128xf32>
    %cst_5 = arith.constant -1.000000e+30 : f32
    %19 = vector.broadcast %cst_5 : f32 to vector<128x128xf32>
    %20 = arith.select %8, %18, %19 : vector<128x128xi1>, vector<128x128xf32>
    %cst_6 = arith.constant dense<0xFF800000> : vector<128xf32>
    %21 = vector.multi_reduction <maximumf>, %20, %cst_6 [0] : vector<128x128xf32> to vector<128xf32>
    %22 = vector.shape_cast %21 : vector<128xf32> to vector<1x128xf32>
    %23 = vector.broadcast %22 : vector<1x128xf32> to vector<128x128xf32>
    %24 = arith.subf %20, %23 : vector<128x128xf32>
    %25 = math.exp %24 : vector<128x128xf32>
    %cst_7 = arith.constant dense<0.000000e+00> : vector<128xf32>
    %26 = vector.multi_reduction <add>, %25, %cst_7 [0] : vector<128x128xf32> to vector<128xf32>
    %27 = vector.shape_cast %26 : vector<128xf32> to vector<1x128xf32>
    %28 = tpu.reciprocal %27 {approx = true} : vector<1x128xf32> -> vector<1x128xf32>
    %29 = vector.broadcast %28 : vector<1x128xf32> to vector<128x128xf32>
    %30 = arith.mulf %25, %29 : vector<128x128xf32>
    %cst_8 = arith.constant 0.000000e+00 : f32
    %31 = vector.broadcast %cst_8 : f32 to vector<128x128xf32>
    %32 = arith.select %8, %30, %31 : vector<128x128xi1>, vector<128x128xf32>
    %33 = arith.truncf %32 : vector<128x128xf32> to vector<128x128xbf16>
    %c0_9 = arith.constant 0 : index
    %c0_10 = arith.constant 0 : index
    %34 = vector.load %arg3[%c0_9, %c0_10] : memref<128x128xbf16, #tpu.memory_space<vmem>>, vector<128x128xbf16>
    tpu.vector_store %arg3[%c0_9, %c0_10], %33 {strides = array<i32>} : memref<128x128xbf16, #tpu.memory_space<vmem>>, vector<128x128xbf16>,
    return
  }
}

</mosaic_0001>

<llo_original>
// kernel: tpu_custom_call.1
$region0: #{tpu_custom_call.1}
  #allocation0 [shape = 'u32[]', space=smem, size = 0x4, offset = 0x4, fixed_abs, tag = 'smem constant byte address 0x4 - core index']
  #allocation1 [shape = 'u32[144,128]{1,0:T(1,128)}', space=vmem, size = 0x12000, scoped, tag = 'internal scratch']
  #allocation2 [shape = 'f32[1]{0:T(128)S(6)}', space=smem, size = 0x200, scoped, tag = 'scoped memory for tpu_custom_call.1']
  %s0 = inlined_call_operand.<no memory space> [shape: f32[1], index: 0, kind: input, shape index: {}]
  %s1 = inlined_call_operand.hbm [shape: f32[128,128], index: 1, kind: input, shape index: {}]
  %s2 = inlined_call_operand.hbm [shape: f32[128,128], index: 2, kind: input, shape index: {}]
  %s3 = inlined_call_operand.hbm [shape: bf16[128,128], index: 3, kind: output, shape index: {}]
  %s4 = sld [smem:[#allocation0]]
  $region30: #{tpu_custom_call.1} parent=0
    _
  %s6 = ssub.s32 1, %s4
  %s7 = scalar_select 0, %s6, %s4
  %8 = sst [smem:[#allocation2]] %s0
  $region1: #{tpu_custom_call.1} parent=0
    #allocation3 [shape = 'u8[65536]{0}', space=vmem, size = 0x10000, scoped, tag = 'input window, operand 1, single buffered']
    #allocation4 [shape = 's32[1]{0}', space=sflag, size = 0x4, scoped, tag = 'scoped memory for tpu_custom_call.1']
    #allocation5 [shape = 's32[1]{0}', space=sflag, size = 0x4, scoped, tag = 'scoped memory for tpu_custom_call.1']
    #allocation6 [shape = 'u8[65536]{0}', space=vmem, size = 0x10000, scoped, tag = 'input window, operand 2, single buffered']
    #allocation7 [shape = 's32[1]{0}', space=sflag, size = 0x4, scoped, tag = 'scoped memory for tpu_custom_call.1']
    #allocation8 [shape = 'u8[32768]{0}', space=vmem, size = 0x8000, scoped, tag = 'output window, operand 0, single buffered']
    %9 = vsyncpa [#allocation4], 0
    %10 = vsyncpa [#allocation7], 0
    %11 = vsyncpa [#allocation5], 0
    // Predicated region
    $region2: #{tpu_custom_call.1} parent=1 // pred_check
      _
    $region3: #{tpu_custom_call.1} parent=1 // pred_check_branch
      %13 = sbr.rel (0) target = $region5
    $region4: #{tpu_custom_call.1} parent=1 // pred_region
      _
    $region5: #{tpu_custom_call.1} parent=1 // pred_fallthru
      _
    // Predicated region
    $region6: #{tpu_custom_call.1} parent=1 // pred_check
      _
    $region7: #{tpu_custom_call.1} parent=1 // pred_check_branch
      %15 = sbr.rel (0) target = $region9
    $region8: #{tpu_custom_call.1} parent=1 // pred_region
      %s17 = ssub.s32 2048, 2048
      %18 = vsyncadd [#allocation4], %s17
      %s19 = sshll.u32 [#allocation3], 4
      %s20 = int_to_ptr.vmem [resolvable:$true] %s19
      %25 = dma.hbm_to_vmem [thread:$0]  %s1, 2048, %s20, [#allocation4], 128, 128, 8
    $region9: #{tpu_custom_call.1} parent=1 // pred_fallthru
      _
    // Predicated region
    $region10: #{tpu_custom_call.1} parent=1 // pred_check
      _
    $region11: #{tpu_custom_call.1} parent=1 // pred_check_branch
      %27 = sbr.rel (0) target = $region13
    $region12: #{tpu_custom_call.1} parent=1 // pred_region
      %s29 = ssub.s32 2048, 2048
      %30 = vsyncadd [#allocation7], %s29
      %s31 = sshll.u32 [#allocation6], 4
      %s32 = int_to_ptr.vmem [resolvable:$true] %s31
      %37 = dma.hbm_to_vmem [thread:$0]  %s2, 2048, %s32, [#allocation7], 128, 128, 8
    $region13: #{tpu_custom_call.1} parent=1 // pred_fallthru
      _
    // Predicated region
    $region14: #{tpu_custom_call.1} parent=1 // pred_check
      _
    $region15: #{tpu_custom_call.1} parent=1 // pred_check_branch
      %39 = sbr.rel (0) target = $region17
    $region16: #{tpu_custom_call.1} parent=1 // pred_region
      %40 = dma.done [#allocation4], 2048
    $region17: #{tpu_custom_call.1} parent=1 // pred_fallthru
      _
    // Predicated region
    $region18: #{tpu_custom_call.1} parent=1 // pred_check
      _
    $region19: #{tpu_custom_call.1} parent=1 // pred_check_branch
      %42 = sbr.rel (0) target = $region21
    $region20: #{tpu_custom_call.1} parent=1 // pred_region
      %43 = dma.done [#allocation7], 2048
    $region21: #{tpu_custom_call.1} parent=1 // pred_fallthru
      _
    %v44 = vld [vmem:[#allocation3] sm:$0xff]
    %v45 = vld [vmem:[#allocation3 + $0x8] sm:$0xff]
    %v46 = vld [vmem:[#allocation3 + $0x10] sm:$0xff]
    %v47 = vld [vmem:[#allocation3 + $0x18] sm:$0xff]
    %v48 = vld [vmem:[#allocation3 + $0x20] sm:$0xff]
    %v49 = vld [vmem:[#allocation3 + $0x28] sm:$0xff]
    %v50 = vld [vmem:[#allocation3 + $0x30] sm:$0xff]
    %v51 = vld [vmem:[#allocation3 + $0x38] sm:$0xff]
    %v52 = vld [vmem:[#allocation3 + $0x40] sm:$0xff]
    %v53 = vld [vmem:[#allocation3 + $0x48] sm:$0xff]
    %v54 = vld [vmem:[#allocation3 + $0x50] sm:$0xff]
    %v55 = vld [vmem:[#allocation3 + $0x58] sm:$0xff]
    %v56 = vld [vmem:[#allocation3 + $0x60] sm:$0xff]
    %v57 = vld [vmem:[#allocation3 + $0x68] sm:$0xff]
    %v58 = vld [vmem:[#allocation3 + $0x70] sm:$0xff]
    %v59 = vld [vmem:[#allocation3 + $0x78] sm:$0xff]
    %v60 = vld [vmem:[#allocation6] sm:$0xff]
    %v61 = vld [vmem:[#allocation6 + $0x8] sm:$0xff]
    %v62 = vld [vmem:[#allocation6 + $0x10] sm:$0xff]
    %v63 = vld [vmem:[#allocation6 + $0x18] sm:$0xff]
    %v64 = vld [vmem:[#allocation6 + $0x20] sm:$0xff]
    %v65 = vld [vmem:[#allocation6 + $0x28] sm:$0xff]
    %v66 = vld [vmem:[#allocation6 + $0x30] sm:$0xff]
    %v67 = vld [vmem:[#allocation6 + $0x38] sm:$0xff]
    %v68 = vld [vmem:[#allocation6 + $0x40] sm:$0xff]
    %v69 = vld [vmem:[#allocation6 + $0x48] sm:$0xff]
    %v70 = vld [vmem:[#allocation6 + $0x50] sm:$0xff]
    %v71 = vld [vmem:[#allocation6 + $0x58] sm:$0xff]
    %v72 = vld [vmem:[#allocation6 + $0x60] sm:$0xff]
    %v73 = vld [vmem:[#allocation6 + $0x68] sm:$0xff]
    %v74 = vld [vmem:[#allocation6 + $0x70] sm:$0xff]
    %v75 = vld [vmem:[#allocation6 + $0x78] sm:$0xff]
    %v76 = vlaneseq
    %v77 = vshrl.u32 %v76, 7
    %v78 = vadd.s32 %v77, 8
    %v79 = vadd.s32 %v77, 16
    %v80 = vadd.s32 %v77, 24
    %v81 = vadd.s32 %v77, 32
    %v82 = vadd.s32 %v77, 40
    %v83 = vadd.s32 %v77, 48
    %v84 = vadd.s32 %v77, 56
    %v85 = vadd.s32 %v77, 64
    %v86 = vadd.s32 %v77, 72
    %v87 = vadd.s32 %v77, 80
    %v88 = vadd.s32 %v77, 88
    %v89 = vadd.s32 %v77, 96
    %v90 = vadd.s32 %v77, 104
    %v91 = vadd.s32 %v77, 112
    %v92 = vadd.s32 %v77, 120
    %v93 = vlaneseq
    %v94 = vand.u32 %v93, 127
    %vm95 = vcmp.lt.s32.totalorder %v77, 128
    %vm96 = vcmp.lt.s32.totalorder %v78, 128
    %vm97 = vcmp.lt.s32.totalorder %v79, 128
    %vm98 = vcmp.lt.s32.totalorder %v80, 128
    %vm99 = vcmp.lt.s32.totalorder %v81, 128
    %vm100 = vcmp.lt.s32.totalorder %v82, 128
    %vm101 = vcmp.lt.s32.totalorder %v83, 128
    %vm102 = vcmp.lt.s32.totalorder %v84, 128
    %vm103 = vcmp.lt.s32.totalorder %v85, 128
    %vm104 = vcmp.lt.s32.totalorder %v86, 128
    %vm105 = vcmp.lt.s32.totalorder %v87, 128
    %vm106 = vcmp.lt.s32.totalorder %v88, 128
    %vm107 = vcmp.lt.s32.totalorder %v89, 128
    %vm108 = vcmp.lt.s32.totalorder %v90, 128
    %vm109 = vcmp.lt.s32.totalorder %v91, 128
    %vm110 = vcmp.lt.s32.totalorder %v92, 128
    %vm111 = vcmp.lt.s32.totalorder %v94, 16
    %vm112 = vmand %vm95, %vm111
    %vm113 = vmand %vm96, %vm111
    %vm114 = vmand %vm97, %vm111
    %vm115 = vmand %vm98, %vm111
    %vm116 = vmand %vm99, %vm111
    %vm117 = vmand %vm100, %vm111
    %vm118 = vmand %vm101, %vm111
    %vm119 = vmand %vm102, %vm111
    %vm120 = vmand %vm103, %vm111
    %vm121 = vmand %vm104, %vm111
    %vm122 = vmand %vm105, %vm111
    %vm123 = vmand %vm106, %vm111
    %vm124 = vmand %vm107, %vm111
    %vm125 = vmand %vm108, %vm111
    %vm126 = vmand %vm109, %vm111
    %vm127 = vmand %vm110, %vm111
    %v128 = vlog2.pop %v60
    %v129 = vmul.f32 %v128, 0.6931472
    %v130 = vlog2.pop %v61
    %v131 = vmul.f32 %v130, 0.6931472
    %v132 = vlog2.pop %v62
    %v133 = vmul.f32 %v132, 0.6931472
    %v134 = vlog2.pop %v63
    %v135 = vmul.f32 %v134, 0.6931472
    %v136 = vlog2.pop %v64
    %v137 = vmul.f32 %v136, 0.6931472
    %v138 = vlog2.pop %v65
    %v139 = vmul.f32 %v138, 0.6931472
    %v140 = vlog2.pop %v66
    %v141 = vmul.f32 %v140, 0.6931472
    %v142 = vlog2.pop %v67
    %v143 = vmul.f32 %v142, 0.6931472
    %v144 = vlog2.pop %v68
    %v145 = vmul.f32 %v144, 0.6931472
    %v146 = vlog2.pop %v69
    %v147 = vmul.f32 %v146, 0.6931472
    %v148 = vlog2.pop %v70
    %v149 = vmul.f32 %v148, 0.6931472
    %v150 = vlog2.pop %v71
    %v151 = vmul.f32 %v150, 0.6931472
    %v152 = vlog2.pop %v72
    %v153 = vmul.f32 %v152, 0.6931472
    %v154 = vlog2.pop %v73
    %v155 = vmul.f32 %v154, 0.6931472
    %v156 = vlog2.pop %v74
    %v157 = vmul.f32 %v156, 0.6931472
    %v158 = vlog2.pop %v75
    %v159 = vmul.f32 %v158, 0.6931472
    %v160 = vsub.f32 0.0, %v129
    %v161 = vsub.f32 0.0, %v131
    %v162 = vsub.f32 0.0, %v133
    %v163 = vsub.f32 0.0, %v135
    %v164 = vsub.f32 0.0, %v137
    %v165 = vsub.f32 0.0, %v139
    %v166 = vsub.f32 0.0, %v141
    %v167 = vsub.f32 0.0, %v143
    %v168 = vsub.f32 0.0, %v145
    %v169 = vsub.f32 0.0, %v147
    %v170 = vsub.f32 0.0, %v149
    %v171 = vsub.f32 0.0, %v151
    %v172 = vsub.f32 0.0, %v153
    %v173 = vsub.f32 0.0, %v155
    %v174 = vsub.f32 0.0, %v157
    %v175 = vsub.f32 0.0, %v159
    %v176 = vlog2.pop %v160
    %v177 = vmul.f32 %v176, 0.6931472
    %v178 = vlog2.pop %v161
    %v179 = vmul.f32 %v178, 0.6931472
    %v180 = vlog2.pop %v162
    %v181 = vmul.f32 %v180, 0.6931472
    %v182 = vlog2.pop %v163
    %v183 = vmul.f32 %v182, 0.6931472
    %v184 = vlog2.pop %v164
    %v185 = vmul.f32 %v184, 0.6931472
    %v186 = vlog2.pop %v165
    %v187 = vmul.f32 %v186, 0.6931472
    %v188 = vlog2.pop %v166
    %v189 = vmul.f32 %v188, 0.6931472
    %v190 = vlog2.pop %v167
    %v191 = vmul.f32 %v190, 0.6931472
    %v192 = vlog2.pop %v168
    %v193 = vmul.f32 %v192, 0.6931472
    %v194 = vlog2.pop %v169
    %v195 = vmul.f32 %v194, 0.6931472
    %v196 = vlog2.pop %v170
    %v197 = vmul.f32 %v196, 0.6931472
    %v198 = vlog2.pop %v171
    %v199 = vmul.f32 %v198, 0.6931472
    %v200 = vlog2.pop %v172
    %v201 = vmul.f32 %v200, 0.6931472
    %v202 = vlog2.pop %v173
    %v203 = vmul.f32 %v202, 0.6931472
    %v204 = vlog2.pop %v174
    %v205 = vmul.f32 %v204, 0.6931472
    %v206 = vlog2.pop %v175
    %v207 = vmul.f32 %v206, 0.6931472
    %v208 = vsub.f32 0.0, %v177
    %v209 = vsub.f32 0.0, %v179
    %v210 = vsub.f32 0.0, %v181
    %v211 = vsub.f32 0.0, %v183
    %v212 = vsub.f32 0.0, %v185
    %v213 = vsub.f32 0.0, %v187
    %v214 = vsub.f32 0.0, %v189
    %v215 = vsub.f32 0.0, %v191
    %v216 = vsub.f32 0.0, %v193
    %v217 = vsub.f32 0.0, %v195
    %v218 = vsub.f32 0.0, %v197
    %v219 = vsub.f32 0.0, %v199
    %v220 = vsub.f32 0.0, %v201
    %v221 = vsub.f32 0.0, %v203
    %v222 = vsub.f32 0.0, %v205
    %v223 = vsub.f32 0.0, %v207
    %v224 = vadd.f32 %v44, %v208
    %v225 = vadd.f32 %v45, %v209
    %v226 = vadd.f32 %v46, %v210
    %v227 = vadd.f32 %v47, %v211
    %v228 = vadd.f32 %v48, %v212
    %v229 = vadd.f32 %v49, %v213
    %v230 = vadd.f32 %v50, %v214
    %v231 = vadd.f32 %v51, %v215
    %v232 = vadd.f32 %v52, %v216
    %v233 = vadd.f32 %v53, %v217
    %v234 = vadd.f32 %v54, %v218
    %v235 = vadd.f32 %v55, %v219
    %v236 = vadd.f32 %v56, %v220
    %v237 = vadd.f32 %v57, %v221
    %v238 = vadd.f32 %v58, %v222
    %v239 = vadd.f32 %v59, %v223
    %s240 = sld [smem:[#allocation2]]
    %v241 = vstv %s240
    %v242 = vmul.f32 %v224, %v241
    %v243 = vmul.f32 %v225, %v241
    %v244 = vmul.f32 %v226, %v241
    %v245 = vmul.f32 %v227, %v241
    %v246 = vmul.f32 %v228, %v241
    %v247 = vmul.f32 %v229, %v241
    %v248 = vmul.f32 %v230, %v241
    %v249 = vmul.f32 %v231, %v241
    %v250 = vmul.f32 %v232, %v241
    %v251 = vmul.f32 %v233, %v241
    %v252 = vmul.f32 %v234, %v241
    %v253 = vmul.f32 %v235, %v241
    %v254 = vmul.f32 %v236, %v241
    %v255 = vmul.f32 %v237, %v241
    %v256 = vmul.f32 %v238, %v241
    %v257 = vmul.f32 %v239, %v241
    %v258 = vsel %vm112, %v242, -1e+30
    %v259 = vsel %vm113, %v243, -1e+30
    %v260 = vsel %vm114, %v244, -1e+30
    %v261 = vsel %vm115, %v245, -1e+30
    %v262 = vsel %vm116, %v246, -1e+30
    %v263 = vsel %vm117, %v247, -1e+30
    %v264 = vsel %vm118, %v248, -1e+30
    %v265 = vsel %vm119, %v249, -1e+30
    %v266 = vsel %vm120, %v250, -1e+30
    %v267 = vsel %vm121, %v251, -1e+30
    %v268 = vsel %vm122, %v252, -1e+30
    %v269 = vsel %vm123, %v253, -1e+30
    %v270 = vsel %vm124, %v254, -1e+30
    %v271 = vsel %vm125, %v255, -1e+30
    %v272 = vsel %vm126, %v256, -1e+30
    %v273 = vsel %vm127, %v257, -1e+30
    %v274 = vmax.f32 %v258, %v262
    %v275 = vmax.f32 %v259, %v263
    %v276 = vmax.f32 %v260, %v264
    %v277 = vmax.f32 %v261, %v265
    %v278 = vmax.f32 %v274, %v266
    %v279 = vmax.f32 %v275, %v267
    %v280 = vmax.f32 %v276, %v268
    %v281 = vmax.f32 %v277, %v269
    %v282 = vmax.f32 %v278, %v270
    %v283 = vmax.f32 %v279, %v271
    %v284 = vmax.f32 %v280, %v272
    %v285 = vmax.f32 %v281, %v273
    %v286 = vmax.f32 %v282, %v283
    %v287 = vmax.f32 %v284, %v285
    %v288 = vmax.f32 %v286, %v287
    %v289 = vrot.slane %v288, 4
    %v290 = vmax.f32 %v288, %v289
    %v291 = vrot.slane %v290, 2
    %v292 = vmax.f32 %v290, %v291
    %v293 = vrot.slane %v292, 1
    %v294 = vmax.f32 %v292, %v293
    %v295 = vsub.f32 %v258, %v294
    %v296 = vsub.f32 %v259, %v294
    %v297 = vsub.f32 %v260, %v294
    %v298 = vsub.f32 %v261, %v294
    %v299 = vsub.f32 %v262, %v294
    %v300 = vsub.f32 %v263, %v294
    %v301 = vsub.f32 %v264, %v294
    %v302 = vsub.f32 %v265, %v294
    %v303 = vsub.f32 %v266, %v294
    %v304 = vsub.f32 %v267, %v294
    %v305 = vsub.f32 %v268, %v294
    %v306 = vsub.f32 %v269, %v294
    %v307 = vsub.f32 %v270, %v294
    %v308 = vsub.f32 %v271, %v294
    %v309 = vsub.f32 %v272, %v294
    %v310 = vsub.f32 %v273, %v294
    %v311 = vmul.f32 %v295, 1.442695
    %v312 = vpow.pop %v311
    %v313 = vmul.f32 %v296, 1.442695
    %v314 = vpow.pop %v313
    %v315 = vmul.f32 %v297, 1.442695
    %v316 = vpow.pop %v315
    %v317 = vmul.f32 %v298, 1.442695
    %v318 = vpow.pop %v317
    %v319 = vmul.f32 %v299, 1.442695
    %v320 = vpow.pop %v319
    %v321 = vmul.f32 %v300, 1.442695
    %v322 = vpow.pop %v321
    %v323 = vmul.f32 %v301, 1.442695
    %v324 = vpow.pop %v323
    %v325 = vmul.f32 %v302, 1.442695
    %v326 = vpow.pop %v325
    %v327 = vmul.f32 %v303, 1.442695
    %v328 = vpow.pop %v327
    %v329 = vmul.f32 %v304, 1.442695
    %v330 = vpow.pop %v329
    %v331 = vmul.f32 %v305, 1.442695
    %v332 = vpow.pop %v331
    %v333 = vmul.f32 %v306, 1.442695
    %v334 = vpow.pop %v333
    %v335 = vmul.f32 %v307, 1.442695
    %v336 = vpow.pop %v335
    %v337 = vmul.f32 %v308, 1.442695
    %v338 = vpow.pop %v337
    %v339 = vmul.f32 %v309, 1.442695
    %v340 = vpow.pop %v339
    %v341 = vmul.f32 %v310, 1.442695
    %v342 = vpow.pop %v341
    %v343 = vadd.f32 %v312, %v314
    %v344 = vadd.f32 %v343, %v316
    %v345 = vadd.f32 %v344, %v318
    %v346 = vadd.f32 %v345, %v320
    %v347 = vadd.f32 %v346, %v322
    %v348 = vadd.f32 %v347, %v324
    %v349 = vadd.f32 %v348, %v326
    %v350 = vadd.f32 %v349, %v328
    %v351 = vadd.f32 %v350, %v330
    %v352 = vadd.f32 %v351, %v332
    %v353 = vadd.f32 %v352, %v334
    %v354 = vadd.f32 %v353, %v336
    %v355 = vadd.f32 %v354, %v338
    %v356 = vadd.f32 %v355, %v340
    %v357 = vadd.f32 %v356, %v342
    %v358 = vrot.slane %v357, 4
    %v359 = vadd.f32 %v357, %v358
    %v360 = vrot.slane %v359, 2
    %v361 = vadd.f32 %v359, %v360
    %v362 = vrot.slane %v361, 1
    %v363 = vadd.f32 %v361, %v362
    %v364 = vrcp.pop %v363
    %v365 = vmul.f32 %v312, %v364
    %v366 = vmul.f32 %v314, %v364
    %v367 = vmul.f32 %v316, %v364
    %v368 = vmul.f32 %v318, %v364
    %v369 = vmul.f32 %v320, %v364
    %v370 = vmul.f32 %v322, %v364
    %v371 = vmul.f32 %v324, %v364
    %v372 = vmul.f32 %v326, %v364
    %v373 = vmul.f32 %v328, %v364
    %v374 = vmul.f32 %v330, %v364
    %v375 = vmul.f32 %v332, %v364
    %v376 = vmul.f32 %v334, %v364
    %v377 = vmul.f32 %v336, %v364
    %v378 = vmul.f32 %v338, %v364
    %v379 = vmul.f32 %v340, %v364
    %v380 = vmul.f32 %v342, %v364
    %v381 = vsel %vm112, %v365, 0.0
    %v382 = vsel %vm113, %v366, 0.0
    %v383 = vsel %vm114, %v367, 0.0
    %v384 = vsel %vm115, %v368, 0.0
    %v385 = vsel %vm116, %v369, 0.0
    %v386 = vsel %vm117, %v370, 0.0
    %v387 = vsel %vm118, %v371, 0.0
    %v388 = vsel %vm119, %v372, 0.0
    %v389 = vsel %vm120, %v373, 0.0
    %v390 = vsel %vm121, %v374, 0.0
    %v391 = vsel %vm122, %v375, 0.0
    %v392 = vsel %vm123, %v376, 0.0
    %v393 = vsel %vm124, %v377, 0.0
    %v394 = vsel %vm125, %v378, 0.0
    %v395 = vsel %vm126, %v379, 0.0
    %v396 = vsel %vm127, %v380, 0.0
    %v397 = vpack.c.bf16 %v382, %v381
    %v398 = vpack.c.bf16 %v384, %v383
    %v399 = vpack.c.bf16 %v386, %v385
    %v400 = vpack.c.bf16 %v388, %v387
    %v401 = vpack.c.bf16 %v390, %v389
    %v402 = vpack.c.bf16 %v392, %v391
    %v403 = vpack.c.bf16 %v394, %v393
    %v404 = vpack.c.bf16 %v396, %v395
    %v413 = vunpack.c.l.b16 %v397
    %v414 = vunpack.c.h.b16 %v397
    %v415 = vunpack.c.l.b16 %v398
    %v416 = vunpack.c.h.b16 %v398
    %v417 = vunpack.c.l.b16 %v399
    %v418 = vunpack.c.h.b16 %v399
    %v419 = vunpack.c.l.b16 %v400
    %v420 = vunpack.c.h.b16 %v400
    %v421 = vunpack.c.l.b16 %v401
    %v422 = vunpack.c.h.b16 %v401
    %v423 = vunpack.c.l.b16 %v402
    %v424 = vunpack.c.h.b16 %v402
    %v425 = vunpack.c.l.b16 %v403
    %v426 = vunpack.c.h.b16 %v403
    %v427 = vunpack.c.l.b16 %v404
    %v428 = vunpack.c.h.b16 %v404
    %v429 = vpack.c.b16 %v413, %v413
    %v430 = vpack.c.b16 %v414, %v414
    %v431 = vpack.c.b16 %v415, %v415
    %v432 = vpack.c.b16 %v416, %v416
    %v433 = vpack.c.b16 %v417, %v417
    %v434 = vpack.c.b16 %v418, %v418
    %v435 = vpack.c.b16 %v419, %v419
    %v436 = vpack.c.b16 %v420, %v420
    %v437 = vpack.c.b16 %v421, %v421
    %v438 = vpack.c.b16 %v422, %v422
    %v439 = vpack.c.b16 %v423, %v423
    %v440 = vpack.c.b16 %v424, %v424
    %v441 = vpack.c.b16 %v425, %v425
    %v442 = vpack.c.b16 %v426, %v426
    %v443 = vpack.c.b16 %v427, %v427
    %v444 = vpack.c.b16 %v428, %v428
    %461 = vst [vmem:[#allocation8] sm:$0xf] %v429
    %462 = vst [vmem:[#allocation8 + $0x4] sm:$0xf] %v430
    %463 = vst [vmem:[#allocation8 + $0x8] sm:$0xf] %v431
    %464 = vst [vmem:[#allocation8 + $0xc] sm:$0xf] %v432
    %465 = vst [vmem:[#allocation8 + $0x10] sm:$0xf] %v433
    %466 = vst [vmem:[#allocation8 + $0x14] sm:$0xf] %v434
    %467 = vst [vmem:[#allocation8 + $0x18] sm:$0xf] %v435
    %468 = vst [vmem:[#allocation8 + $0x1c] sm:$0xf] %v436
    %469 = vst [vmem:[#allocation8 + $0x20] sm:$0xf] %v437
    %470 = vst [vmem:[#allocation8 + $0x24] sm:$0xf] %v438
    %471 = vst [vmem:[#allocation8 + $0x28] sm:$0xf] %v439
    %472 = vst [vmem:[#allocation8 + $0x2c] sm:$0xf] %v440
    %473 = vst [vmem:[#allocation8 + $0x30] sm:$0xf] %v441
    %474 = vst [vmem:[#allocation8 + $0x34] sm:$0xf] %v442
    %475 = vst [vmem:[#allocation8 + $0x38] sm:$0xf] %v443
    %476 = vst [vmem:[#allocation8 + $0x3c] sm:$0xf] %v444
    // Predicated region
    $region22: #{tpu_custom_call.1} parent=1 // pred_check
      _
    $region23: #{tpu_custom_call.1} parent=1 // pred_check_branch
      %478 = sbr.rel (0) target = $region25
    $region24: #{tpu_custom_call.1} parent=1 // pred_region
      %s480 = ssub.s32 1024, 1024
      %481 = vsyncadd [#allocation5], %s480
      %s482 = sshll.u32 [#allocation8], 4
      %s483 = int_to_ptr.vmem [resolvable:$true] %s482
      %488 = dma.vmem_to_hbm [thread:$0]  %s483, 1024, %s3, [#allocation5], 64, 64, 4
    $region25: #{tpu_custom_call.1} parent=1 // pred_fallthru
      _
    // Predicated region
    $region26: #{tpu_custom_call.1} parent=1 // pred_check
      _
    $region27: #{tpu_custom_call.1} parent=1 // pred_check_branch
      %490 = sbr.rel (0) target = $region29
    $region28: #{tpu_custom_call.1} parent=1 // pred_region
      %491 = dma.done [#allocation5], 1024
    $region29: #{tpu_custom_call.1} parent=1 // pred_fallthru
      _
    %492 = vsyncpa [#allocation4], 1
    %493 = vsyncpa [#allocation7], 1
    %494 = vsyncpa [#allocation5], 1

</llo_original>
